<compile_context>
chip_gen: v7x
topology: tpu7x:2x2x1
jax: 0.10.0
libtpu: 0.0.40
codegen_flags: <defaults>
</compile_context>

<pallas_src>
import functools
import numpy as np
import jax
import jax.numpy as jnp
from jax.experimental import pallas as pl
from jax.experimental.pallas import tpu as pltpu


# ----------------------------------------------------------------------------
# Deterministic parameter construction (replicates spline_factory / bs, df-mode)
# ----------------------------------------------------------------------------
def _cox_de_boor(x, t, degree):
    """B-spline basis matrix via Cox-de Boor recursion (equivalent to splev
    with unit coefficient vectors)."""
    x = np.asarray(x, dtype=float)
    t = np.asarray(t, dtype=float)
    m = len(t) - 1
    B = np.zeros((x.shape[0], m))
    for i in range(m):
        if t[i] < t[i + 1]:
            cond = (x >= t[i]) & (x < t[i + 1])
            if t[i + 1] == t[-1]:
                cond |= (x == t[i + 1])
            B[:, i] = cond.astype(float)
    for d in range(1, degree + 1):
        Bn = np.zeros((x.shape[0], m - d))
        for i in range(m - d):
            term = np.zeros(x.shape[0])
            den1 = t[i + d] - t[i]
            den2 = t[i + d + 1] - t[i + 1]
            if den1 > 0:
                term = term + (x - t[i]) / den1 * B[:, i]
            if den2 > 0:
                term = term + (t[i + d + 1] - x) / den2 * B[:, i + 1]
            Bn[:, i] = term
        B = Bn
    return B  # (len(x), len(t) - degree - 1)


def bs_basis(x, df, degree=3, intercept=True):
    order = degree + 1
    n_inner = df - order + (1 - intercept)
    if n_inner > 0:
        inner = np.percentile(x, 100 * np.linspace(0, 1, n_inner + 2)[1:-1])
    else:
        inner = np.array([], dtype=float)
    all_knots = np.concatenate(([np.min(x), np.max(x)] * order, inner))
    all_knots.sort()
    basis = _cox_de_boor(np.asarray(x, float), all_knots, degree)
    if not intercept:
        basis = basis[:, 1:]
    return basis


def spline_factory_np(n, df, log=False):
    # TODO(synk): log=True branch (log-distance knots) not needed for default module config.
    dist = np.arange(n)
    return bs_basis(dist, df=df, intercept=True).astype(np.float32)  # (n, df)


def make_params(in_channels, out_channels, kernel_size, df, scaled=True, seed=0):
    # spline weight: torch does spline_factory(K, df).view(df, 1, K)  (raw reshape!)
    basis = spline_factory_np(kernel_size, df)                  # (K, df)
    spline_w = basis.reshape(df, 1, kernel_size)                # raw row-major reshape
    if scaled:
        spline_w = spline_w / kernel_size
    ws = jnp.asarray(spline_w[:, 0, :], dtype=jnp.float32)      # (df, K)

    # 1x1 conv params: PyTorch default uniform(-sqrt(k), sqrt(k)), k = 1/(C*df*1)
    key = jax.random.PRNGKey(seed)
    k_w, k_b = jax.random.split(key)
    fan_in = in_channels * df
    bound = 1.0 / np.sqrt(fan_in)
    w1 = jax.random.uniform(k_w, (out_channels, fan_in), jnp.float32, -bound, bound)
    bias = jax.random.uniform(k_b, (out_channels,), jnp.float32, -bound, bound)
    return ws, w1, bias


# ----------------------------------------------------------------------------
# Pallas kernel: in-kernel unfold (halo tile) + one fused matmul per tile
# ----------------------------------------------------------------------------
def _bspline_conv_kernel(w_ref, xm_ref, xh_ref, o_ref, *, K, TL):
    # w_ref : (O, K*C+1)  fused (spline x 1x1) weight, bias folded into last column
    # xm_ref: (C, TL)     main padded-input tile (lane axis = per-batch length)
    # xh_ref: (C, 128)    halo tile (next 128 samples) so windows may spill past TL
    # o_ref : (O, TL)
    x_full = jnp.concatenate([xm_ref[...], xh_ref[...]], axis=-1)      # (C, TL+128)
    rows = [x_full[:, k:k + TL] for k in range(K)]                     # K static lane shifts
    ones = jnp.ones((1, TL), dtype=x_full.dtype)                       # bias row
    rhs = jnp.concatenate(rows + [ones], axis=0)                       # (K*C+1, TL)
    o_ref[...] = jnp.dot(
        w_ref[...], rhs, preferred_element_type=jnp.float32
    ).astype(o_ref.dtype)


def bspline_conv1d(x, ws, w1, bias, *, kernel_size, padding, tile_length=4096):
    """x: (B, C, L) float32 -> (B, O, L_out) float32 (stride=1, dilation=1, groups=1).

    tile_length: per-grid-step length tile (multiple of 128). ~4096 for v6e,
    2048-4096 for v5e, 8192-16384 recommended on v7x.
    """
    B, C, L = x.shape
    df, K = ws.shape
    O = w1.shape[0]
    assert K == kernel_size
    assert K - 1 <= 128, "halo tile assumes kernel_size <= 129"
    L_out = L + 2 * padding - (K - 1)
    assert L_out > 0, "degenerate output length (kernel_size - 1 > L + 2*padding)"

    # --- exact algebraic fusion of spline conv + 1x1 conv; bias folded in ----
    # RHS rows are ordered (k, c), so flatten the fused weight as (O, K, C).
    w_kc = jnp.einsum('ocd,dk->okc', w1.reshape(O, C, df), ws).reshape(O, K * C)
    w_aug = jnp.concatenate([w_kc, bias.reshape(O, 1)], axis=1)        # (O, K*C+1)

    # --- length tiling (per batch), final-layout output -----------------------
    HALO = 128                                        # >= K-1, multiple of 128
    TL = max(128, 128 * (int(tile_length) // 128))    # multiple of 128
    TL = min(TL, 128 * pl.cdiv(L_out, 128))           # don't exceed padded per-batch length
    n_tiles = pl.cdiv(L_out, TL)
    L_pad = n_tiles * TL
    tl_blocks = TL // 128

    # Single padded copy of the input: conv padding + tail zeros so the last
    # halo block stays in bounds. (No K-fold im2col materialisation.)
    Lp_total = L_pad + HALO
    xpad = jnp.pad(x, ((0, 0), (0, 0), (padding, Lp_total - L - padding)))

    kernel = functools.partial(_bspline_conv_kernel, K=K, TL=TL)

    flops = 2 * O * (K * C + 1) * B * L_pad
    bytes_accessed = 4 * (B * C * Lp_total + B * n_tiles * C * HALO
                          + B * O * L_pad + O * (K * C + 1))

    out = pl.pallas_call(
        kernel,
        out_shape=jax.ShapeDtypeStruct((B, O, L_pad), jnp.float32),
        grid=(B, n_tiles),
        in_specs=[
            pl.BlockSpec((O, K * C + 1), lambda b, t: (0, 0)),            # fused weight (resident)
            pl.BlockSpec((None, C, TL), lambda b, t: (b, 0, t)),          # main length tile
            pl.BlockSpec((None, C, HALO),
                         lambda b, t: (b, 0, (t + 1) * tl_blocks)),       # halo tile (next 128)
        ],
        out_specs=pl.BlockSpec((None, O, TL), lambda b, t: (b, 0, t)),    # final layout
        compiler_params=pltpu.CompilerParams(
            dimension_semantics=("parallel", "parallel")),
        cost_estimate=pl.CostEstimate(flops=flops, transcendentals=0,
                                      bytes_accessed=bytes_accessed),
    )(w_aug, xpad, xpad)

    # NOTE: columns [L_out, L_pad) of the padded output are garbage (conv over
    # zero padding + bias) and must not be read; we slice them off here.
    return out[:, :, :L_out]


# ----------------------------------------------------------------------------
# Pure-JAX reference (same two-stage math as the PyTorch forward, unfused)
# ----------------------------------------------------------------------------
def reference(x, ws, w1, bias, *, kernel_size, padding):
    B, C, L = x.shape
    df, K = ws.shape
    L_out = L + 2 * padding - (K - 1)
    xpad = jnp.pad(x, ((0, 0), (0, 0), (padding, padding)))
    X = jnp.stack([xpad[:, :, k:k + L_out] for k in range(K)], axis=2)  # (B, C, K, Lo)
    S = jnp.einsum('dk,bckl->bcdl', ws, X)                              # (B, C, df, Lo)
    S2 = S.reshape(B, C * df, L_out)
    return jnp.einsum('oi,bil->bol', w1, S2) + bias[None, :, None]


if __name__ == "__main__":
    # Module config: BSplineConv1D(in_channels=4, out_channels=8, kernel_size=5,
    #                              degrees_of_freedom=6, padding=2)  (stride=1, groups=1)
    B, C, L = 2, 4, 16
    K, DF, O, PAD = 5, 6, 8, 2

    ws, w1, bias = make_params(C, O, K, DF, scaled=True, seed=0)

    key = jax.random.PRNGKey(0)
    x = jax.random.normal(key, (B, C, L), dtype=jnp.float32)

    out = bspline_conv1d(x, ws, w1, bias, kernel_size=K, padding=PAD)
    out = jax.block_until_ready(out)

    ref = jax.block_until_ready(reference(x, ws, w1, bias, kernel_size=K, padding=PAD))
    assert out.shape == ref.shape and out.dtype == jnp.float32
    np.testing.assert_allclose(np.asarray(out), np.asarray(ref), rtol=1e-4, atol=1e-5)

    # Multi-tile sanity check: exercises the halo path across tile boundaries.
    x2 = jax.random.normal(jax.random.PRNGKey(1), (B, C, 300), dtype=jnp.float32)
    out2 = jax.block_until_ready(
        bspline_conv1d(x2, ws, w1, bias, kernel_size=K, padding=PAD, tile_length=128))
    ref2 = jax.block_until_ready(reference(x2, ws, w1, bias, kernel_size=K, padding=PAD))
    np.testing.assert_allclose(np.asarray(out2), np.asarray(ref2), rtol=1e-4, atol=1e-5)

    print("KERNEL_OK")
</pallas_src>

<mosaic_0001>
module attributes {stable_mosaic.version = 11 : i64} {
  func.func @_bspline_conv_kernel(%arg0: i32, %arg1: i32, %arg2: memref<8x21xf32, #tpu.memory_space<vmem>>, %arg3: memref<1x4x128xf32, #tpu.memory_space<vmem>>, %arg4: memref<1x4x128xf32, #tpu.memory_space<vmem>>, %arg5: memref<1x8x128xf32, #tpu.memory_space<vmem>>) attributes {dimension_semantics = [#tpu.dimension_semantics<parallel>, #tpu.dimension_semantics<parallel>], iteration_bounds = array<i64: 2, 1>, scalar_prefetch = 0 : i64, scratch_operands = 0 : i64, tpu.core_type = #tpu.core_type<tc>, window_params = [{pipeline_mode = #tpu.pipeline_mode<synchronous>, transform_indices = @transform_0, window_bounds = array<i64: 8, 21>}, {transform_indices = @transform_1, window_bounds = array<i64: 1, 4, 128>}, {transform_indices = @transform_2, window_bounds = array<i64: 1, 4, 128>}, {transform_indices = @transform_3, window_bounds = array<i64: 1, 8, 128>}]} {
    %c0 = arith.constant 0 : index
    %c0_0 = arith.constant 0 : index
    %c0_1 = arith.constant 0 : index
    %0 = vector.load %arg3[%c0, %c0_0, %c0_1] : memref<1x4x128xf32, #tpu.memory_space<vmem>>, vector<1x4x128xf32>
    %1 = vector.shape_cast %0 : vector<1x4x128xf32> to vector<4x128xf32>
    %c0_2 = arith.constant 0 : index
    %c0_3 = arith.constant 0 : index
    %c0_4 = arith.constant 0 : index
    %2 = vector.load %arg4[%c0_2, %c0_3, %c0_4] : memref<1x4x128xf32, #tpu.memory_space<vmem>>, vector<1x4x128xf32>
    %3 = vector.shape_cast %2 : vector<1x4x128xf32> to vector<4x128xf32>
    %4 = tpu.concatenate %1, %3 in 1 : vector<4x128xf32>, vector<4x128xf32> -> vector<4x256xf32>
    %5 = vector.extract_strided_slice %4 {offsets = [0, 0], sizes = [4, 128], strides = [1, 1]} : vector<4x256xf32> to vector<4x128xf32>
    %6 = vector.extract_strided_slice %4 {offsets = [0, 1], sizes = [4, 128], strides = [1, 1]} : vector<4x256xf32> to vector<4x128xf32>
    %7 = vector.extract_strided_slice %4 {offsets = [0, 2], sizes = [4, 128], strides = [1, 1]} : vector<4x256xf32> to vector<4x128xf32>
    %8 = vector.extract_strided_slice %4 {offsets = [0, 3], sizes = [4, 128], strides = [1, 1]} : vector<4x256xf32> to vector<4x128xf32>
    %9 = vector.extract_strided_slice %4 {offsets = [0, 4], sizes = [4, 128], strides = [1, 1]} : vector<4x256xf32> to vector<4x128xf32>
    %cst = arith.constant 1.000000e+00 : f32
    %10 = vector.broadcast %cst : f32 to vector<1x128xf32>
    %11 = tpu.concatenate %5, %6, %7, %8, %9, %10 in 0 : vector<4x128xf32>, vector<4x128xf32>, vector<4x128xf32>, vector<4x128xf32>, vector<4x128xf32>, vector<1x128xf32> -> vector<21x128xf32>
    %c0_5 = arith.constant 0 : index
    %c0_6 = arith.constant 0 : index
    %12 = vector.load %arg2[%c0_5, %c0_6] : memref<8x21xf32, #tpu.memory_space<vmem>>, vector<8x21xf32>
    %cst_7 = arith.constant dense<0.000000e+00> : vector<8x128xf32>
    %13 = tpu.matmul %12, %11, %cst_7 {dimension_numbers = #tpu.dot_dimension_numbers<[1], [0], [0], [1], [0, 0, 1, 1], [], []>} : vector<8x21xf32>, vector<21x128xf32>, vector<8x128xf32> -> vector<8x128xf32>
    %c0_8 = arith.constant 0 : index
    %c0_9 = arith.constant 0 : index
    %c0_10 = arith.constant 0 : index
    %14 = vector.load %arg5[%c0_8, %c0_9, %c0_10] : memref<1x8x128xf32, #tpu.memory_space<vmem>>, vector<1x8x128xf32>
    %15 = vector.shape_cast %14 : vector<1x8x128xf32> to vector<8x128xf32>
    %16 = vector.shape_cast %13 : vector<8x128xf32> to vector<1x8x128xf32>
    tpu.vector_store %arg5[%c0_8, %c0_9, %c0_10], %16 {strides = array<i32>} : memref<1x8x128xf32, #tpu.memory_space<vmem>>, vector<1x8x128xf32>,
    return
  }
  func.func @transform_0(%arg0: i32, %arg1: i32) -> (i32, i32) {
    %c0_i32 = arith.constant 0 : i32
    %c0_i32_0 = arith.constant 0 : i32
    %c0_i32_1 = arith.constant 0 : i32
    return %c0_i32, %c0_i32_0 : i32, i32
  }
  func.func @transform_1(%arg0: i32, %arg1: i32) -> (i32, i32, i32) {
    %c0_i32 = arith.constant 0 : i32
    %c0_i32_0 = arith.constant 0 : i32
    return %arg0, %c0_i32, %arg1 : i32, i32, i32
  }
  func.func @transform_2(%arg0: i32, %arg1: i32) -> (i32, i32, i32) {
    %c1_i32 = arith.constant 1 : i32
    %0 = arith.addi %arg1, %c1_i32 : i32
    %c1_i32_0 = arith.constant 1 : i32
    %1 = arith.muli %0, %c1_i32_0 : i32
    %c0_i32 = arith.constant 0 : i32
    %c0_i32_1 = arith.constant 0 : i32
    return %arg0, %c0_i32, %1 : i32, i32, i32
  }
  func.func @transform_3(%arg0: i32, %arg1: i32) -> (i32, i32, i32) {
    %c0_i32 = arith.constant 0 : i32
    %c0_i32_0 = arith.constant 0 : i32
    return %arg0, %c0_i32, %arg1 : i32, i32, i32
  }
}

</mosaic_0001>

<llo_original>
// kernel: tpu_custom_call.1
$region0: #{tpu_custom_call.1}
  #allocation0 [shape = 'u32[]', space=smem, size = 0x4, offset = 0x4, fixed_abs, tag = 'smem constant byte address 0x4 - core index']
  #allocation1 [shape = 'u32[144,128]{1,0:T(1,128)}', space=vmem, size = 0x12000, scoped, tag = 'internal scratch']
  %s0 = inlined_call_operand.hbm [shape: f32[8,21], index: 0, kind: input, shape index: {}]
  %s1 = inlined_call_operand.hbm [shape: f32[2,4,256], index: 1, kind: input, shape index: {}]
  %s2 = inlined_call_operand.hbm [shape: f32[2,4,256], index: 2, kind: input, shape index: {}]
  %s3 = inlined_call_operand.hbm [shape: f32[2,8,128], index: 3, kind: output, shape index: {}]
  %s4 = sld [smem:[#allocation0]]
  $region57: #{tpu_custom_call.1} parent=0
    _
  %s6 = ssub.s32 1, %s4
  %s7 = scalar_select 0, %s6, %s4
  $region1: #{tpu_custom_call.1} parent=0
    #allocation2 [shape = 'u8[4096]{0}', space=vmem, size = 0x1000, scoped, tag = 'input window, operand 0, single buffered']
    #allocation3 [shape = 's32[2]{0}', space=sflag, size = 0x8, scoped, tag = 'scoped memory for tpu_custom_call.1']
    #allocation4 [shape = 's32[2]{0}', space=sflag, size = 0x8, scoped, tag = 'scoped memory for tpu_custom_call.1']
    #allocation5 [shape = 'u8[4096]{0}', space=vmem, size = 0x1000, scoped, tag = 'input window, operand 1']
    #allocation6 [shape = 's32[2]{0}', space=sflag, size = 0x8, scoped, tag = 'scoped memory for tpu_custom_call.1']
    #allocation7 [shape = 'u8[4096]{0}', space=vmem, size = 0x1000, scoped, tag = 'input window, operand 2']
    #allocation8 [shape = 'u8[8192]{0}', space=vmem, size = 0x2000, scoped, tag = 'output window, operand 0']
    %8 = vsyncpa [#allocation3], 0
    %9 = vsyncpa [#allocation6], 0
    %s10 = scalar_lea.sflag [#allocation6], 1
    %11 = vsyncpa %s10, 0
    %12 = vsyncpa [#allocation4], 0
    %s13 = scalar_lea.sflag [#allocation4], 1
    %14 = vsyncpa %s13, 0
    loop: start=0, step=1, limit=4
    $region2: #{tpu_custom_call.1} parent=1 // loop_pre_header
      _
    $region3: #{tpu_custom_call.1} parent=1 // loop_header
      %s16 = sphi 0, %s20
      %p17 = scmp.ge.s32.totalorder %s16, 4
      %s23 = sphi 0, %s35
      %s24 = sphi 0, %s31
      %s25 = sphi 0, %s23
      %s26 = sphi 0, %s24
      %s27 = sphi 0, %s25
      %s28 = sphi 0, %s26
      %s36 = sphi 0, %s36
      %s38 = sphi 0, %s36
      %s39 = sphi 0, %s38
      %s53 = sphi 0, %s39
      %s61 = sphi 0, %s63
      %s64 = sphi 0, %s61
      %s65 = sphi 0, %s64
      %s81 = sphi 0, %s65
      %s91 = sphi 0, %s93
      %s94 = sphi 0, %s91
      %s95 = sphi 0, %s94
      %s111 = sphi 0, %s95
      %s119 = sphi 0, %s121
      %s122 = sphi 0, %s119
      %s123 = sphi 0, %s122
      %s139 = sphi 0, %s123
    $region4: #{tpu_custom_call.1} parent=1 // loop_header_branch
      %19 = sbr.rel (%p17) target = $region8
    $region5: #{tpu_custom_call.1} parent=1 // loop_body
      %s21 = ssub.s32 %s16, 1
      %s22 = ssub.s32 %s16, 2
      %s29 = sadd.s32 1, %s24
      %p30 = scmp.ge.s32.totalorder %s29, 1
      %s31 = scalar_select %p30, 0, %s29
      %s32 = sadd.s32 1, %s23
      %s33 = scalar_select %p30, %s32, %s23
      %p34 = scmp.ge.s32.totalorder %s33, 2
      %s35 = scalar_select %p34, 0, %s33
      %s37 = sadd.s32 %s36, 1
      %p40 = scmp.eq.s32.totalorder %s16, 1
      %p41 = scmp.ne.s32.totalorder %s36, %s38
      %p42 = scmp.eq.s32.totalorder %s16, 0
      %p43 = por %p41, %p42
      %p44 = scmp.ne.s32.totalorder %s36, %s38
      %p45 = scmp.eq.s32.totalorder %s21, 1
      %p46 = por %p44, %p45
      %p47 = scmp.ne.s32.totalorder %s38, %s39
      %p48 = scmp.eq.s32.totalorder %s21, 0
      %p49 = por %p47, %p48
      %p50 = scmp.ne.s32.totalorder %s38, %s39
      %p51 = scmp.eq.s32.totalorder %s22, 1
      %p52 = por %p50, %p51
      %p54 = scmp.ne.s32.totalorder %s39, %s53
      %p55 = scmp.eq.s32.totalorder %s22, 0
      %p56 = por %p54, %p55
      %s57 = ssub.s32 %s23, %s35
      %s58 = ssub.s32 %s24, %s31
      %s59 = sor.u32 %s57, %s58
      %p60 = scmp.eq.s32.totalorder %s59, 0
      %s62 = sadd.s32 %s61, 1
      %s63 = scalar_select %p60, %s61, %s62
      %p66 = pneg %p60
      %p67 = scmp.eq.s32.totalorder %s16, 1
      %p68 = por %p66, %p67
      %p69 = scmp.ne.s32.totalorder %s61, %s64
      %p70 = scmp.eq.s32.totalorder %s16, 0
      %p71 = por %p69, %p70
      %p72 = scmp.ne.s32.totalorder %s61, %s64
      %p73 = scmp.eq.s32.totalorder %s21, 1
      %p74 = por %p72, %p73
      %p75 = scmp.ne.s32.totalorder %s64, %s65
      %p76 = scmp.eq.s32.totalorder %s21, 0
      %p77 = por %p75, %p76
      %p78 = scmp.ne.s32.totalorder %s64, %s65
      %p79 = scmp.eq.s32.totalorder %s22, 1
      %p80 = por %p78, %p79
      %p82 = scmp.ne.s32.totalorder %s65, %s81
      %p83 = scmp.eq.s32.totalorder %s22, 0
      %p84 = por %p82, %p83
      %s85 = sadd.s32 %s24, 1
      %s86 = sadd.s32 %s31, 1
      %s87 = ssub.s32 %s23, %s35
      %s88 = ssub.s32 %s85, %s86
      %s89 = sor.u32 %s87, %s88
      %p90 = scmp.eq.s32.totalorder %s89, 0
      %s92 = sadd.s32 %s91, 1
      %s93 = scalar_select %p90, %s91, %s92
      %p96 = pneg %p90
      %p97 = scmp.eq.s32.totalorder %s16, 1
      %p98 = por %p96, %p97
      %p99 = scmp.ne.s32.totalorder %s91, %s94
      %p100 = scmp.eq.s32.totalorder %s16, 0
      %p101 = por %p99, %p100
      %p102 = scmp.ne.s32.totalorder %s91, %s94
      %p103 = scmp.eq.s32.totalorder %s21, 1
      %p104 = por %p102, %p103
      %p105 = scmp.ne.s32.totalorder %s94, %s95
      %p106 = scmp.eq.s32.totalorder %s21, 0
      %p107 = por %p105, %p106
      %p108 = scmp.ne.s32.totalorder %s94, %s95
      %p109 = scmp.eq.s32.totalorder %s22, 1
      %p110 = por %p108, %p109
      %p112 = scmp.ne.s32.totalorder %s95, %s111
      %p113 = scmp.eq.s32.totalorder %s22, 0
      %p114 = por %p112, %p113
      %s115 = ssub.s32 %s23, %s35
      %s116 = ssub.s32 %s24, %s31
      %s117 = sor.u32 %s115, %s116
      %p118 = scmp.eq.s32.totalorder %s117, 0
      %s120 = sadd.s32 %s119, 1
      %s121 = scalar_select %p118, %s119, %s120
      %p124 = pneg %p118
      %p125 = scmp.eq.s32.totalorder %s16, 1
      %p126 = por %p124, %p125
      %p127 = scmp.ne.s32.totalorder %s119, %s122
      %p128 = scmp.eq.s32.totalorder %s16, 0
      %p129 = por %p127, %p128
      %p130 = scmp.ne.s32.totalorder %s119, %s122
      %p131 = scmp.eq.s32.totalorder %s21, 1
      %p132 = por %p130, %p131
      %p133 = scmp.ne.s32.totalorder %s122, %s123
      %p134 = scmp.eq.s32.totalorder %s21, 0
      %p135 = por %p133, %p134
      %p136 = scmp.ne.s32.totalorder %s122, %s123
      %p137 = scmp.eq.s32.totalorder %s22, 1
      %p138 = por %p136, %p137
      %p140 = scmp.ne.s32.totalorder %s123, %s139
      %p141 = scmp.eq.s32.totalorder %s22, 0
      %p142 = por %p140, %p141
      %p143 = scmp.le.s32.totalorder 1, %s16
      %p144 = scmp.lt.s32.totalorder %s16, 3
      %p145 = pnand %p143, %p144
      %p146 = pneg %p145
      // Predicated region
      $region9: #{tpu_custom_call.1} parent=5 // pred_check
        _
      $region10: #{tpu_custom_call.1} parent=5 // pred_check_branch
        %148 = sbr.rel (%p145) target = $region12
      $region11: #{tpu_custom_call.1} parent=5 // pred_region
        %s149 = ssub.s32 %s16, 1
        // Predicated region
        $region13: #{tpu_custom_call.1} parent=11 // pred_check
          %p150 = pneg %p49
        $region14: #{tpu_custom_call.1} parent=11 // pred_check_branch
          %152 = sbr.rel (%p150) target = $region16
        $region15: #{tpu_custom_call.1} parent=11 // pred_region
          %s154 = ssub.s32 128, 128
          %155 = vsyncadd [#allocation3], %s154
          %s157 = sshll.u32 [#allocation2], 4
          %s158 = int_to_ptr.vmem [resolvable:$true] %s157
          %160 = dma.hbm_to_vmem [thread:$0]  %s0, 128, %s158, [#allocation3]
        $region16: #{tpu_custom_call.1} parent=11 // pred_fallthru
          _
      $region12: #{tpu_custom_call.1} parent=5 // pred_fallthru
        _
      %p161 = scmp.lt.s32.totalorder %s16, 2
      // Predicated region
      $region17: #{tpu_custom_call.1} parent=5 // pred_check
        %p162 = pneg %p161
      $region18: #{tpu_custom_call.1} parent=5 // pred_check_branch
        %164 = sbr.rel (%p162) target = $region20
      $region19: #{tpu_custom_call.1} parent=5 // pred_region
        // Predicated region
        $region21: #{tpu_custom_call.1} parent=19 // pred_check
          %p165 = pneg %p71
        $region22: #{tpu_custom_call.1} parent=19 // pred_check_branch
          %167 = sbr.rel (%p165) target = $region24
        $region23: #{tpu_custom_call.1} parent=19 // pred_region
          %s168 = sand.u32 %s16, 1
          %s169 = scalar_lea.sflag [#allocation6], %s168
          %s170 = sand.u32 %s61, 1
          %s171 = smul.addr %s170, 4
          %s172 = scalar_lea.vmem [#allocation5], %s171
          %s174 = ssub.s32 64, 64
          %175 = vsyncadd %s169, %s174
          %s176 = smul.addr %s23, 2
          %s177 = sadd.s32 %s24, %s176
          %s178 = smul.addr %s177, 64
          %s179 = scalar_lea.hbm %s1, %s178
          %s181 = sshll.u32 %s172, 4
          %s182 = int_to_ptr.vmem [resolvable:$true] %s181
          %184 = dma.hbm_to_vmem [thread:$0]  %s179, 64, %s182, %s169
        $region24: #{tpu_custom_call.1} parent=19 // pred_fallthru
          _
        // Predicated region
        $region25: #{tpu_custom_call.1} parent=19 // pred_check
          %p185 = pneg %p101
        $region26: #{tpu_custom_call.1} parent=19 // pred_check_branch
          %187 = sbr.rel (%p185) target = $region28
        $region27: #{tpu_custom_call.1} parent=19 // pred_region
          %s188 = sand.u32 %s16, 1
          %s189 = scalar_lea.sflag [#allocation6], %s188
          %s190 = sand.u32 %s91, 1
          %s191 = smul.addr %s190, 4
          %s192 = scalar_lea.vmem [#allocation7], %s191
          %s193 = sadd.s32 %s24, 1
          %s195 = ssub.s32 64, 64
          %196 = vsyncadd %s189, %s195
          %s197 = smul.addr %s23, 2
          %s198 = sadd.s32 %s193, %s197
          %s199 = smul.addr %s198, 64
          %s200 = scalar_lea.hbm %s2, %s199
          %s202 = sshll.u32 %s192, 4
          %s203 = int_to_ptr.vmem [resolvable:$true] %s202
          %205 = dma.hbm_to_vmem [thread:$0]  %s200, 64, %s203, %s189
        $region28: #{tpu_custom_call.1} parent=19 // pred_fallthru
          _
      $region20: #{tpu_custom_call.1} parent=5 // pred_fallthru
        _
      %p206 = scmp.le.s32.totalorder 1, %s16
      %p207 = scmp.lt.s32.totalorder %s16, 3
      %p208 = pnand %p206, %p207
      %p209 = pneg %p208
      // Predicated region
      $region29: #{tpu_custom_call.1} parent=5 // pred_check
        _
      $region30: #{tpu_custom_call.1} parent=5 // pred_check_branch
        %211 = sbr.rel (%p208) target = $region32
      $region31: #{tpu_custom_call.1} parent=5 // pred_region
        %s212 = ssub.s32 %s16, 1
        // Predicated region
        $region33: #{tpu_custom_call.1} parent=31 // pred_check
          %p213 = pneg %p49
        $region34: #{tpu_custom_call.1} parent=31 // pred_check_branch
          %215 = sbr.rel (%p213) target = $region36
        $region35: #{tpu_custom_call.1} parent=31 // pred_region
          %216 = dma.done [#allocation3], 128
        $region36: #{tpu_custom_call.1} parent=31 // pred_fallthru
          _
        %s217 = sand.u32 %s21, 1
        %s218 = scalar_lea.sflag [#allocation6], %s217
        %s219 = sand.u32 %s64, 1
        %s220 = smul.addr %s219, 4
        %s221 = scalar_lea.vmem [#allocation5], %s220
        // Predicated region
        $region37: #{tpu_custom_call.1} parent=31 // pred_check
          %p222 = pneg %p77
        $region38: #{tpu_custom_call.1} parent=31 // pred_check_branch
          %224 = sbr.rel (%p222) target = $region40
        $region39: #{tpu_custom_call.1} parent=31 // pred_region
          %225 = dma.done %s218, 64
        $region40: #{tpu_custom_call.1} parent=31 // pred_fallthru
          _
        %s226 = sand.u32 %s21, 1
        %s227 = scalar_lea.sflag [#allocation6], %s226
        %s228 = sand.u32 %s94, 1
        %s229 = smul.addr %s228, 4
        %s230 = scalar_lea.vmem [#allocation7], %s229
        // Predicated region
        $region41: #{tpu_custom_call.1} parent=31 // pred_check
          %p231 = pneg %p107
        $region42: #{tpu_custom_call.1} parent=31 // pred_check_branch
          %233 = sbr.rel (%p231) target = $region44
        $region43: #{tpu_custom_call.1} parent=31 // pred_region
          %234 = dma.done %s227, 64
        $region44: #{tpu_custom_call.1} parent=31 // pred_fallthru
          _
        %p235 = pneg %p49
        %p236 = pneg %p46
        %s237 = sand.u32 %s21, 1
        %s238 = scalar_lea.sflag [#allocation6], %s237
        %s239 = sand.u32 %s64, 1
        %s240 = smul.addr %s239, 4
        %s241 = scalar_lea.vmem [#allocation5], %s240
        %p242 = pneg %p77
        %p243 = pneg %p74
        %s244 = sand.u32 %s21, 1
        %s245 = scalar_lea.sflag [#allocation6], %s244
        %s246 = sand.u32 %s94, 1
        %s247 = smul.addr %s246, 4
        %s248 = scalar_lea.vmem [#allocation7], %s247
        %p249 = pneg %p107
        %p250 = pneg %p104
        %p251 = pneg %p135
        %p252 = pneg %p132
        %s253 = sand.u32 %s122, 1
        %s254 = scalar_lea.sflag [#allocation4], %s253
        %s255 = sand.u32 %s122, 1
        %s256 = smul.addr %s255, 8
        %s257 = scalar_lea.vmem [#allocation8], %s256
        %s258 = sadd.s32 %s26, 1
        %v259 = vld [vmem:[%s221] sm:$0xf]
        %v260 = vld [vmem:[%s230] sm:$0xf]
        %v263 = vrot.slane %v259, 4
        %v264 = vrot.slane %v260, 4
        %265 = vrot.lane.b32.xlu0 %v263, 127
        %v266 = vpop.permute.xlu0 %265
        %267 = vrot.lane.b32.xlu0 %v264, 127
        %v268 = vpop.permute.xlu0 %267
        %vm269 = vcmask 1039360
        %v270 = vsel %vm269, %v266, %v268
        %272 = vrot.lane.b32.xlu0 %v259, 126
        %v273 = vpop.permute.xlu0 %272
        %274 = vrot.lane.b32.xlu0 %v260, 126
        %v275 = vpop.permute.xlu0 %274
        %vm276 = vcmask 1031168
        %v277 = vsel %vm276, %v273, %v275
        %279 = vrot.lane.b32.xlu0 %v263, 125
        %v280 = vpop.permute.xlu0 %279
        %281 = vrot.lane.b32.xlu0 %v264, 125
        %v282 = vpop.permute.xlu0 %281
        %vm283 = vcmask 1022976
        %v284 = vsel %vm283, %v280, %v282
        %286 = vrot.lane.b32.xlu0 %v259, 124
        %v287 = vpop.permute.xlu0 %286
        %288 = vrot.lane.b32.xlu0 %v260, 124
        %v289 = vpop.permute.xlu0 %288
        %vm290 = vcmask 1014784
        %v291 = vsel %vm290, %v287, %v289
        %vm293 = vcmask 1043456
        %v294 = vsel %vm293, %v259, %v270
        %v295 = vsel %vm293, %v277, %v284
        %v296 = vsel %vm293, %v291, 1.0
        %v297 = vld [vmem:[#allocation2] sm:$0xff]
        %vm298 = vcmask 171008
        %v300 = vsel %vm298, %v297, 0
        %vm302 = vcmask 1044480
        %v304 = vsel %vm302, %v296, 0
        %306 = vmatprep.subr.mxu0 0.0
        %307 = vmatpush1.msra.mxu0 %v294
        %308 = vmatprep.subr.mxu0 0.0
        %309 = vmatpush1.msra.mxu0 %v295
        %310 = vmatprep.subr.mxu0 0.0
        %311 = vmatpush1.msra.mxu0 %v304
        %312 = vmatprep.subr.mxu0 0.0
        %313 = vmatpush1.msra.mxu0 0.0
        %314 = vmatprep.subr.mxu0 0.0
        %315 = vmatpush1.msra.mxu0 0.0
        %316 = vmatprep.subr.mxu0 0.0
        %317 = vmatpush1.msra.mxu0 0.0
        %318 = vmatprep.subr.mxu0 0.0
        %319 = vmatpush1.msra.mxu0 0.0
        %320 = vmatprep.subr.mxu0 0.0
        %321 = vmatpush1.msra.mxu0 0.0
        %322 = vmatprep.subr.mxu0 0.0
        %323 = vmatpush1.msra.mxu0 0.0
        %324 = vmatprep.subr.mxu0 0.0
        %325 = vmatpush1.msra.mxu0 0.0
        %326 = vmatprep.subr.mxu0 0.0
        %327 = vmatpush1.msra.mxu0 0.0
        %328 = vmatprep.subr.mxu0 0.0
        %329 = vmatpush1.msra.mxu0 0.0
        %330 = vmatprep.subr.mxu0 0.0
        %331 = vmatpush1.msra.mxu0 0.0
        %332 = vmatprep.subr.mxu0 0.0
        %333 = vmatpush1.msra.mxu0 0.0
        %334 = vmatprep.subr.mxu0 0.0
        %335 = vmatpush1.msra.mxu0 0.0
        %336 = vmatprep.subr.mxu0 0.0
        %337 = vmatpush1.msra.mxu0 0.0
        %338 = vmatprep.subr.mxu0 0.0
        %339 = vmatpush1.msra.mxu0 0.0
        %340 = vmatprep.subr.mxu0 0.0
        %341 = vmatpush1.msra.mxu0 0.0
        %342 = vmatprep.subr.mxu0 0.0
        %343 = vmatpush1.msra.mxu0 0.0
        %344 = vmatprep.subr.mxu0 0.0
        %345 = vmatpush1.msra.mxu0 0.0
        %346 = vmatprep.subr.mxu0 0.0
        %347 = vmatpush1.msra.mxu0 0.0
        %348 = vmatprep.subr.mxu0 0.0
        %349 = vmatpush1.msra.mxu0 0.0
        %350 = vmatprep.subr.mxu0 0.0
        %351 = vmatpush1.msra.mxu0 0.0
        %352 = vmatprep.subr.mxu0 0.0
        %353 = vmatpush1.msra.mxu0 0.0
        %354 = vmatprep.subr.mxu0 0.0
        %355 = vmatpush1.msra.mxu0 0.0
        %356 = vmatprep.subr.mxu0 0.0
        %357 = vmatpush1.msra.mxu0 0.0
        %358 = vmatprep.subr.mxu0 0.0
        %359 = vmatpush1.msra.mxu0 0.0
        %360 = vmatprep.subr.mxu0 0.0
        %361 = vmatpush1.msra.mxu0 0.0
        %362 = vmatprep.subr.mxu0 0.0
        %363 = vmatpush1.msra.mxu0 0.0
        %364 = vmatprep.subr.mxu0 0.0
        %365 = vmatpush1.msra.mxu0 0.0
        %366 = vmatprep.subr.mxu0 0.0
        %367 = vmatpush1.msra.mxu0 0.0
        %368 = vmatprep.subr.mxu0 0.0
        %369 = vmatpush1.msra.mxu0 0.0
        %370 = vmatprep.mubr.f32.mxu0 0.0
        %371 = vmatmul.mubr.f32.gmra.mrb[0].mxu0 %v300
        %v372 = vpop.f32.mrb[0].mxu0
        %v373 = vadd.f32 0.0, %v372
        %v374 = vpop.f32.mrb[0].mxu0
        %375 = vdwg.mxu0
        %376 = vst [vmem:[%s257] sm:$0xff] %v373
        %s377 = sand.u32 %s122, 1
        %s378 = scalar_lea.sflag [#allocation4], %s377
        %s379 = sand.u32 %s122, 1
        %s380 = smul.addr %s379, 8
        %s381 = scalar_lea.vmem [#allocation8], %s380
        // Predicated region
        $region45: #{tpu_custom_call.1} parent=31 // pred_check
          %p382 = pneg %p132
        $region46: #{tpu_custom_call.1} parent=31 // pred_check_branch
          %384 = sbr.rel (%p382) target = $region48
        $region47: #{tpu_custom_call.1} parent=31 // pred_region
          %s386 = ssub.s32 128, 128
          %387 = vsyncadd %s378, %s386
          %s388 = sadd.s32 %s26, %s25
          %s389 = smul.addr %s388, 128
          %s390 = scalar_lea.hbm %s3, %s389
          %s392 = sshll.u32 %s381, 4
          %s393 = int_to_ptr.vmem [resolvable:$true] %s392
          %395 = dma.vmem_to_hbm [thread:$0]  %s393, 128, %s390, %s378
        $region48: #{tpu_custom_call.1} parent=31 // pred_fallthru
          _
      $region32: #{tpu_custom_call.1} parent=5 // pred_fallthru
        _
      %p396 = scmp.le.s32.totalorder 2, %s16
      // Predicated region
      $region49: #{tpu_custom_call.1} parent=5 // pred_check
        %p397 = pneg %p396
      $region50: #{tpu_custom_call.1} parent=5 // pred_check_branch
        %399 = sbr.rel (%p397) target = $region52
      $region51: #{tpu_custom_call.1} parent=5 // pred_region
        %s400 = ssub.s32 %s16, 2
        // Predicated region
        $region53: #{tpu_custom_call.1} parent=51 // pred_check
          %p401 = pneg %p138
        $region54: #{tpu_custom_call.1} parent=51 // pred_check_branch
          %403 = sbr.rel (%p401) target = $region56
        $region55: #{tpu_custom_call.1} parent=51 // pred_region
          %s404 = sand.u32 %s123, 1
          %s405 = scalar_lea.sflag [#allocation4], %s404
          %s406 = sand.u32 %s123, 1
          %s407 = smul.addr %s406, 8
          %s408 = scalar_lea.vmem [#allocation8], %s407
          %409 = dma.done %s405, 128
        $region56: #{tpu_custom_call.1} parent=51 // pred_fallthru
          _
      $region52: #{tpu_custom_call.1} parent=5 // pred_fallthru
        _
    $region6: #{tpu_custom_call.1} parent=1 // loop_footer
      %s20 = sadd.s32 1, %s16
    $region7: #{tpu_custom_call.1} parent=1 // loop_footer_branch
      %15 = sbr.rel target = $region3
    $region8: #{tpu_custom_call.1} parent=1 // loop_exit
      _
    %410 = vsyncpa [#allocation3], 1
    %s411 = scalar_lea.sflag [#allocation3], 1
    %412 = vsyncpa %s411, 1
    %413 = vsyncpa [#allocation6], 1
    %s414 = scalar_lea.sflag [#allocation6], 1
    %415 = vsyncpa %s414, 1
    %416 = vsyncpa [#allocation4], 1
    %s417 = scalar_lea.sflag [#allocation4], 1
    %418 = vsyncpa %s417, 1

</llo_original>
